<compile_context>
chip_gen: v7x
topology: tpu7x:2x2x1
jax: 0.10.0
libtpu: 0.0.40
codegen_flags: <defaults>
</compile_context>

<pallas_src>
import functools

import jax
import jax.numpy as jnp
from jax.experimental import pallas as pl
from jax.experimental.pallas import tpu as pltpu


# Large finite negative: identical softmax result to -inf for any partially-masked row,
# but avoids NaN rows (torch's masked_fill(-inf) gives NaN for fully-masked rows).
_MASK_VALUE = -1e30


def _sdpa_kernel(*refs, inv_temperature, with_mask, with_attn):
    if with_mask:
        q_ref, k_ref, v_ref, mask_ref = refs[:4]
        rest = refs[4:]
    else:
        q_ref, k_ref, v_ref = refs[:3]
        mask_ref = None
        rest = refs[3:]
    out_ref = rest[0]
    attn_ref = rest[1] if with_attn else None

    # Fold the 1/temperature scale into q (TB*TQ*Dk elems) instead of the scores.
    q = q_ref[...] * inv_temperature      # (TB, TQ, Dk)
    k = k_ref[...]                        # (TB, Lk, Dk)
    v = v_ref[...]                        # (TB, Lk, Dv)

    # scores[b, i, j] = sum_d q[b, i, d] * k[b, j, d]
    # Contract on k's last dim directly -- no explicit k.T (saves an XLU pass).
    scores = jax.lax.dot_general(
        q, k,
        dimension_numbers=(((2,), (2,)), ((0,), (0,))),
        preferred_element_type=jnp.float32,
    )                                     # (TB, TQ, Lk) f32

    if with_mask:
        scores = jnp.where(mask_ref[...] != 0, _MASK_VALUE, scores)

    # Row softmax (torch dim=2), f32 throughout.
    m = jnp.max(scores, axis=-1, keepdims=True)
    e = jnp.exp(scores - m)
    denom = jnp.sum(e, axis=-1, keepdims=True)
    attn = e * pl.reciprocal(denom, approx=True)   # EUP vrcp slot

    if with_attn:
        attn_ref[...] = attn.astype(attn_ref.dtype)

    # output = attn @ v   (dropout is identity in eval mode).
    out = jax.lax.dot_general(
        attn.astype(v.dtype), v,
        dimension_numbers=(((2,), (1,)), ((0,), (0,))),
        preferred_element_type=jnp.float32,
    )                                     # (TB, TQ, Dv) f32
    out_ref[...] = out.astype(out_ref.dtype)


def _tile_sizes(B, Lq, Lk):
    # Lq tile: whole extent for short sequences (block == full dim is always legal),
    # else 128-row tiles (divisible by 8 -> valid block; partial last tile is masked).
    tq = Lq if Lq <= 128 else 128
    # Batch tile: amortize per-grid-step overhead for tiny per-batch work while
    # keeping the f32 (TB, TQ, Lk) score working set around <= 2 MiB (VMEM-safe on
    # v7x with double-buffered q/attn/mask tiles).
    score_bytes = max(tq * Lk * 4, 1)
    tb = max(1, min(B, (2 * 1024 * 1024) // score_bytes))
    return tb, tq


def scaled_dot_product_attention(q, k, v, mask=None, *, temperature=1.0,
                                 dropout=0.0, return_attn=True):
    """Pallas TPU implementation of ScaledDotProductAttention.forward (eval mode)."""
    # TODO(synk): training-mode dropout (random Bernoulli mask on attn) not implemented;
    # eval-mode identity used.
    del dropout

    B, Lq, Dk = q.shape
    Bk, Lk, Dk2 = k.shape
    Bv, Lkv, Dv = v.shape
    assert (Bk, Dk2) == (B, Dk), "k shape mismatch"
    assert (Bv, Lkv) == (B, Lk), "v shape mismatch"

    with_mask = mask is not None
    if with_mask:
        mask_i8 = mask.astype(jnp.int8)   # 1 byte/elem HBM read instead of 4
        assert mask_i8.shape == (B, Lq, Lk)

    tb, tq = _tile_sizes(B, Lq, Lk)
    grid = (pl.cdiv(B, tb), pl.cdiv(Lq, tq))

    q_spec = pl.BlockSpec((tb, tq, Dk), lambda b, i: (b, i, 0))
    k_spec = pl.BlockSpec((tb, Lk, Dk), lambda b, i: (b, 0, 0))
    v_spec = pl.BlockSpec((tb, Lk, Dv), lambda b, i: (b, 0, 0))
    in_specs = [q_spec, k_spec, v_spec]
    args = [q, k, v]
    if with_mask:
        in_specs.append(pl.BlockSpec((tb, tq, Lk), lambda b, i: (b, i, 0)))
        args.append(mask_i8)

    out_spec_o = pl.BlockSpec((tb, tq, Dv), lambda b, i: (b, i, 0))
    if return_attn:
        out_shape = (jax.ShapeDtypeStruct((B, Lq, Dv), q.dtype),
                     jax.ShapeDtypeStruct((B, Lq, Lk), q.dtype))
        out_specs = [out_spec_o,
                     pl.BlockSpec((tb, tq, Lk), lambda b, i: (b, i, 0))]
    else:
        out_shape = jax.ShapeDtypeStruct((B, Lq, Dv), q.dtype)
        out_specs = out_spec_o

    kernel = functools.partial(
        _sdpa_kernel,
        inv_temperature=1.0 / float(temperature),
        with_mask=with_mask,
        with_attn=return_attn,
    )

    result = pl.pallas_call(
        kernel,
        out_shape=out_shape,
        grid_spec=pltpu.PrefetchScalarGridSpec(
            num_scalar_prefetch=0,
            grid=grid,
            in_specs=in_specs,
            out_specs=out_specs,
        ),
        compiler_params=pltpu.CompilerParams(
            dimension_semantics=("parallel", "parallel"),
        ),
    )(*args)

    if return_attn:
        out, attn = result
        return out, attn
    return result, None


def _reference(q, k, v, mask, temperature):
    attn = jnp.einsum("bqd,bkd->bqk", q, k) / temperature
    if mask is not None:
        attn = jnp.where(mask, -jnp.inf, attn)
    attn = jax.nn.softmax(attn, axis=2)
    out = jnp.einsum("bqk,bkd->bqd", attn, v)
    return out, attn


if __name__ == "__main__":
    key = jax.random.PRNGKey(0)
    kq, kk, kv, km = jax.random.split(key, 4)

    B, Lq, Lk, Dk, Dv = 2, 8, 8, 32, 32
    temperature = float(Dk) ** 0.5  # typical: sqrt(d_k)

    q = jax.random.normal(kq, (B, Lq, Dk), dtype=jnp.float32)
    k = jax.random.normal(kk, (B, Lk, Dk), dtype=jnp.float32)
    v = jax.random.normal(kv, (B, Lk, Dv), dtype=jnp.float32)
    # Mask a few random positions (True == masked), ensure no row is fully masked.
    mask = jax.random.bernoulli(km, p=0.2, shape=(B, Lq, Lk))
    mask = mask.at[:, :, 0].set(False)

    # Masked path (returns attn, matching the torch module).
    out, attn = scaled_dot_product_attention(
        q, k, v, mask, temperature=temperature, dropout=0.1
    )
    out = jax.block_until_ready(out)
    attn = jax.block_until_ready(attn)

    ref_out, ref_attn = _reference(q, k, v, mask, temperature)
    # Tolerance accounts for the EUP approximate reciprocal in the softmax denom.
    assert jnp.allclose(out, ref_out, atol=2e-3, rtol=2e-3)
    assert jnp.allclose(attn, ref_attn, atol=2e-3, rtol=2e-3)

    # No-mask path (no mask DMA at all).
    out2, attn2 = scaled_dot_product_attention(q, k, v, None, temperature=temperature)
    out2 = jax.block_until_ready(out2)
    ref_out2, ref_attn2 = _reference(q, k, v, None, temperature)
    assert jnp.allclose(out2, ref_out2, atol=2e-3, rtol=2e-3)
    assert jnp.allclose(attn2, ref_attn2, atol=2e-3, rtol=2e-3)

    # Output-only path (skips the attn HBM write entirely).
    out3, _ = scaled_dot_product_attention(
        q, k, v, mask, temperature=temperature, return_attn=False
    )
    out3 = jax.block_until_ready(out3)
    assert jnp.allclose(out3, ref_out, atol=2e-3, rtol=2e-3)

    print("KERNEL_OK")
</pallas_src>

<mosaic_0001>
module attributes {stable_mosaic.version = 11 : i64} {
  func.func @_sdpa_kernel(%arg0: i32, %arg1: i32, %arg2: memref<2x8x32xf32, #tpu.memory_space<vmem>>, %arg3: memref<2x8x32xf32, #tpu.memory_space<vmem>>, %arg4: memref<2x8x32xf32, #tpu.memory_space<vmem>>, %arg5: memref<2x8x8xi8, #tpu.memory_space<vmem>>, %arg6: memref<2x8x32xf32, #tpu.memory_space<vmem>>, %arg7: memref<2x8x8xf32, #tpu.memory_space<vmem>>) attributes {dimension_semantics = [#tpu.dimension_semantics<parallel>, #tpu.dimension_semantics<parallel>], iteration_bounds = array<i64: 1, 1>, scalar_prefetch = 0 : i64, scratch_operands = 0 : i64, tpu.core_type = #tpu.core_type<tc>, window_params = [{transform_indices = @transform_0, window_bounds = array<i64: 2, 8, 32>}, {transform_indices = @transform_1, window_bounds = array<i64: 2, 8, 32>}, {transform_indices = @transform_2, window_bounds = array<i64: 2, 8, 32>}, {transform_indices = @transform_3, window_bounds = array<i64: 2, 8, 8>}, {transform_indices = @transform_4, window_bounds = array<i64: 2, 8, 32>}, {transform_indices = @transform_5, window_bounds = array<i64: 2, 8, 8>}]} {
    %c0 = arith.constant 0 : index
    %c0_0 = arith.constant 0 : index
    %c0_1 = arith.constant 0 : index
    %0 = vector.load %arg2[%c0, %c0_0, %c0_1] : memref<2x8x32xf32, #tpu.memory_space<vmem>>, vector<2x8x32xf32>
    %cst = arith.constant 0.176776692 : f32
    %1 = vector.broadcast %cst : f32 to vector<2x8x32xf32>
    %2 = arith.mulf %0, %1 : vector<2x8x32xf32>
    %c0_2 = arith.constant 0 : index
    %c0_3 = arith.constant 0 : index
    %c0_4 = arith.constant 0 : index
    %3 = vector.load %arg3[%c0_2, %c0_3, %c0_4] : memref<2x8x32xf32, #tpu.memory_space<vmem>>, vector<2x8x32xf32>
    %c0_5 = arith.constant 0 : index
    %c0_6 = arith.constant 0 : index
    %c0_7 = arith.constant 0 : index
    %4 = vector.load %arg4[%c0_5, %c0_6, %c0_7] : memref<2x8x32xf32, #tpu.memory_space<vmem>>, vector<2x8x32xf32>
    %cst_8 = arith.constant dense<0.000000e+00> : vector<2x8x8xf32>
    %5 = tpu.matmul %2, %3, %cst_8 {dimension_numbers = #tpu.dot_dimension_numbers<[2], [2], [1], [1], [0, 0, 0, 1, 1, 1], [0], [0]>} : vector<2x8x32xf32>, vector<2x8x32xf32>, vector<2x8x8xf32> -> vector<2x8x8xf32>
    %c0_9 = arith.constant 0 : index
    %c0_10 = arith.constant 0 : index
    %c0_11 = arith.constant 0 : index
    %6 = vector.load %arg5[%c0_9, %c0_10, %c0_11] : memref<2x8x8xi8, #tpu.memory_space<vmem>>, vector<2x8x8xi8>
    %c0_i8 = arith.constant 0 : i8
    %7 = vector.broadcast %c0_i8 : i8 to vector<2x8x8xi8>
    %8 = arith.cmpi ne, %6, %7 : vector<2x8x8xi8>
    %cst_12 = arith.constant -1.000000e+30 : f32
    %9 = vector.broadcast %cst_12 : f32 to vector<2x8x8xf32>
    %10 = arith.select %8, %9, %5 : vector<2x8x8xi1>, vector<2x8x8xf32>
    %cst_13 = arith.constant dense<0xFF800000> : vector<2x8xf32>
    %11 = vector.multi_reduction <maximumf>, %10, %cst_13 [2] : vector<2x8x8xf32> to vector<2x8xf32>
    %12 = vector.shape_cast %11 : vector<2x8xf32> to vector<2x8x1xf32>
    %13 = vector.broadcast %12 : vector<2x8x1xf32> to vector<2x8x8xf32>
    %14 = arith.subf %10, %13 : vector<2x8x8xf32>
    %15 = math.exp %14 : vector<2x8x8xf32>
    %cst_14 = arith.constant dense<0.000000e+00> : vector<2x8xf32>
    %16 = vector.multi_reduction <add>, %15, %cst_14 [2] : vector<2x8x8xf32> to vector<2x8xf32>
    %17 = vector.shape_cast %16 : vector<2x8xf32> to vector<2x8x1xf32>
    %18 = tpu.reciprocal %17 {approx = true} : vector<2x8x1xf32> -> vector<2x8x1xf32>
    %19 = vector.broadcast %18 : vector<2x8x1xf32> to vector<2x8x8xf32>
    %20 = arith.mulf %15, %19 : vector<2x8x8xf32>
    %c0_15 = arith.constant 0 : index
    %c0_16 = arith.constant 0 : index
    %c0_17 = arith.constant 0 : index
    %21 = vector.load %arg7[%c0_15, %c0_16, %c0_17] : memref<2x8x8xf32, #tpu.memory_space<vmem>>, vector<2x8x8xf32>
    tpu.vector_store %arg7[%c0_15, %c0_16, %c0_17], %20 {strides = array<i32>} : memref<2x8x8xf32, #tpu.memory_space<vmem>>, vector<2x8x8xf32>,
    %cst_18 = arith.constant dense<0.000000e+00> : vector<2x8x32xf32>
    %22 = tpu.matmul %20, %4, %cst_18 {dimension_numbers = #tpu.dot_dimension_numbers<[2], [1], [1], [2], [0, 0, 0, 1, 1, 2], [0], [0]>} : vector<2x8x8xf32>, vector<2x8x32xf32>, vector<2x8x32xf32> -> vector<2x8x32xf32>
    %c0_19 = arith.constant 0 : index
    %c0_20 = arith.constant 0 : index
    %c0_21 = arith.constant 0 : index
    %23 = vector.load %arg6[%c0_19, %c0_20, %c0_21] : memref<2x8x32xf32, #tpu.memory_space<vmem>>, vector<2x8x32xf32>
    tpu.vector_store %arg6[%c0_19, %c0_20, %c0_21], %22 {strides = array<i32>} : memref<2x8x32xf32, #tpu.memory_space<vmem>>, vector<2x8x32xf32>,
    return
  }
  func.func @transform_0(%arg0: i32, %arg1: i32) -> (i32, i32, i32) {
    %c0_i32 = arith.constant 0 : i32
    %c0_i32_0 = arith.constant 0 : i32
    return %arg0, %arg1, %c0_i32 : i32, i32, i32
  }
  func.func @transform_1(%arg0: i32, %arg1: i32) -> (i32, i32, i32) {
    %c0_i32 = arith.constant 0 : i32
    %c0_i32_0 = arith.constant 0 : i32
    %c0_i32_1 = arith.constant 0 : i32
    return %arg0, %c0_i32, %c0_i32_0 : i32, i32, i32
  }
  func.func @transform_2(%arg0: i32, %arg1: i32) -> (i32, i32, i32) {
    %c0_i32 = arith.constant 0 : i32
    %c0_i32_0 = arith.constant 0 : i32
    %c0_i32_1 = arith.constant 0 : i32
    return %arg0, %c0_i32, %c0_i32_0 : i32, i32, i32
  }
  func.func @transform_3(%arg0: i32, %arg1: i32) -> (i32, i32, i32) {
    %c0_i32 = arith.constant 0 : i32
    %c0_i32_0 = arith.constant 0 : i32
    return %arg0, %arg1, %c0_i32 : i32, i32, i32
  }
  func.func @transform_4(%arg0: i32, %arg1: i32) -> (i32, i32, i32) {
    %c0_i32 = arith.constant 0 : i32
    %c0_i32_0 = arith.constant 0 : i32
    return %arg0, %arg1, %c0_i32 : i32, i32, i32
  }
  func.func @transform_5(%arg0: i32, %arg1: i32) -> (i32, i32, i32) {
    %c0_i32 = arith.constant 0 : i32
    %c0_i32_0 = arith.constant 0 : i32
    return %arg0, %arg1, %c0_i32 : i32, i32, i32
  }
}

</mosaic_0001>

<llo_original>
// kernel: tpu_custom_call.1
$region0: #{tpu_custom_call.1}
  #allocation0 [shape = 'u32[]', space=smem, size = 0x4, offset = 0x4, fixed_abs, tag = 'smem constant byte address 0x4 - core index']
  #allocation1 [shape = 'u32[144,128]{1,0:T(1,128)}', space=vmem, size = 0x12000, scoped, tag = 'internal scratch']
  %s0 = inlined_call_operand.hbm [shape: f32[2,8,32], index: 0, kind: input, shape index: {}]
  %s1 = inlined_call_operand.hbm [shape: f32[2,8,32], index: 1, kind: input, shape index: {}]
  %s2 = inlined_call_operand.hbm [shape: f32[2,8,32], index: 2, kind: input, shape index: {}]
  %s3 = inlined_call_operand.vmem [shape: s8[2,8,8], index: 3, kind: input, shape index: {}]
  %s4 = inlined_call_operand.hbm [shape: f32[2,8,32], index: 4, kind: output, shape index: {0}]
  %s5 = inlined_call_operand.hbm [shape: f32[2,8,8], index: 5, kind: output, shape index: {1}]
  %6 = xla_tuple %s4, %s5
  %s7 = sld [smem:[#allocation0]]
  $region46: #{tpu_custom_call.1} parent=0
    _
  %s9 = ssub.s32 1, %s7
  %s10 = scalar_select 0, %s9, %s7
  $region1: #{tpu_custom_call.1} parent=0
    #allocation2 [shape = 'u8[8192]{0}', space=vmem, size = 0x2000, scoped, tag = 'input window, operand 0, single buffered']
    #allocation3 [shape = 's32[1]{0}', space=sflag, size = 0x4, scoped, tag = 'scoped memory for tpu_custom_call.1']
    #allocation4 [shape = 's32[1]{0}', space=sflag, size = 0x4, scoped, tag = 'scoped memory for tpu_custom_call.1']
    #allocation5 [shape = 'u8[8192]{0}', space=vmem, size = 0x2000, scoped, tag = 'input window, operand 1, single buffered']
    #allocation6 [shape = 's32[1]{0}', space=sflag, size = 0x4, scoped, tag = 'scoped memory for tpu_custom_call.1']
    #allocation7 [shape = 'u8[8192]{0}', space=vmem, size = 0x2000, scoped, tag = 'input window, operand 2, single buffered']
    #allocation8 [shape = 'u8[8192]{0}', space=vmem, size = 0x2000, scoped, tag = 'output window, operand 0, single buffered']
    #allocation9 [shape = 'u8[8192]{0}', space=vmem, size = 0x2000, scoped, tag = 'output window, operand 1, single buffered']
    #allocation10 [shape = 's32[1]{0}', space=sflag, size = 0x4, scoped, tag = 'scoped memory for tpu_custom_call.1']
    %11 = vsyncpa [#allocation3], 0
    %12 = vsyncpa [#allocation6], 0
    %13 = vsyncpa [#allocation4], 0
    %14 = vsyncpa [#allocation10], 0
    // Predicated region
    $region2: #{tpu_custom_call.1} parent=1 // pred_check
      _
    $region3: #{tpu_custom_call.1} parent=1 // pred_check_branch
      %16 = sbr.rel (0) target = $region5
    $region4: #{tpu_custom_call.1} parent=1 // pred_region
      %s18 = ssub.s32 256, 256
      %19 = vsyncadd [#allocation3], %s18
      %s20 = sshll.u32 [#allocation2], 4
      %s21 = int_to_ptr.vmem [resolvable:$true] %s20
      %26 = dma.hbm_to_vmem [thread:$0]  %s0, 256, %s21, [#allocation3], 128, 128, 8
    $region5: #{tpu_custom_call.1} parent=1 // pred_fallthru
      _
    // Predicated region
    $region6: #{tpu_custom_call.1} parent=1 // pred_check
      _
    $region7: #{tpu_custom_call.1} parent=1 // pred_check_branch
      %28 = sbr.rel (0) target = $region9
    $region8: #{tpu_custom_call.1} parent=1 // pred_region
      %s30 = ssub.s32 256, 256
      %31 = vsyncadd [#allocation6], %s30
      %s32 = sshll.u32 [#allocation5], 4
      %s33 = int_to_ptr.vmem [resolvable:$true] %s32
      %38 = dma.hbm_to_vmem [thread:$0]  %s1, 256, %s33, [#allocation6], 128, 128, 8
    $region9: #{tpu_custom_call.1} parent=1 // pred_fallthru
      _
    // Predicated region
    $region10: #{tpu_custom_call.1} parent=1 // pred_check
      _
    $region11: #{tpu_custom_call.1} parent=1 // pred_check_branch
      %40 = sbr.rel (0) target = $region13
    $region12: #{tpu_custom_call.1} parent=1 // pred_region
      %s42 = ssub.s32 256, 256
      %43 = vsyncadd [#allocation6], %s42
      %s44 = sshll.u32 [#allocation7], 4
      %s45 = int_to_ptr.vmem [resolvable:$true] %s44
      %50 = dma.hbm_to_vmem [thread:$0]  %s2, 256, %s45, [#allocation6], 128, 128, 8
    $region13: #{tpu_custom_call.1} parent=1 // pred_fallthru
      _
    // Predicated region
    $region14: #{tpu_custom_call.1} parent=1 // pred_check
      _
    $region15: #{tpu_custom_call.1} parent=1 // pred_check_branch
      %52 = sbr.rel (0) target = $region17
    $region16: #{tpu_custom_call.1} parent=1 // pred_region
      _
    $region17: #{tpu_custom_call.1} parent=1 // pred_fallthru
      _
    // Predicated region
    $region18: #{tpu_custom_call.1} parent=1 // pred_check
      _
    $region19: #{tpu_custom_call.1} parent=1 // pred_check_branch
      %54 = sbr.rel (0) target = $region21
    $region20: #{tpu_custom_call.1} parent=1 // pred_region
      %55 = dma.done [#allocation3], 256
    $region21: #{tpu_custom_call.1} parent=1 // pred_fallthru
      _
    // Predicated region
    $region22: #{tpu_custom_call.1} parent=1 // pred_check
      _
    $region23: #{tpu_custom_call.1} parent=1 // pred_check_branch
      %57 = sbr.rel (0) target = $region25
    $region24: #{tpu_custom_call.1} parent=1 // pred_region
      %58 = dma.done [#allocation6], 256
    $region25: #{tpu_custom_call.1} parent=1 // pred_fallthru
      _
    // Predicated region
    $region26: #{tpu_custom_call.1} parent=1 // pred_check
      _
    $region27: #{tpu_custom_call.1} parent=1 // pred_check_branch
      %60 = sbr.rel (0) target = $region29
    $region28: #{tpu_custom_call.1} parent=1 // pred_region
      %61 = dma.done [#allocation6], 256
    $region29: #{tpu_custom_call.1} parent=1 // pred_fallthru
      _
    %v64 = vld [vmem:[#allocation2] sm:$0xff]
    %v65 = vld [vmem:[#allocation2 + $0x8] sm:$0xff]
    %v66 = vmul.f32 %v64, 0.17677669
    %v67 = vmul.f32 %v65, 0.17677669
    %v68 = vld [vmem:[#allocation5] sm:$0xff]
    %v69 = vld [vmem:[#allocation5 + $0x8] sm:$0xff]
    %v70 = vld [vmem:[#allocation7] sm:$0xff]
    %v71 = vld [vmem:[#allocation7 + $0x8] sm:$0xff]
    %vm72 = vcmask 261120
    %v74 = vsel %vm72, %v66, 0
    %v77 = vsel %vm72, %v68, 0
    %79 = vmatprep.subr.mxu0 0.0
    %80 = vmatpush1.xpose.msra.mxu0 %v77
    %81 = vmatprep.subr.mxu0 0.0
    %82 = vmatpush1.xpose.msra.mxu0 0.0
    %83 = vmatprep.subr.mxu0 0.0
    %84 = vmatpush1.xpose.msra.mxu0 0.0
    %85 = vmatprep.subr.mxu0 0.0
    %86 = vmatpush1.xpose.msra.mxu0 0.0
    %87 = vmatprep.subr.mxu0 0.0
    %88 = vmatpush1.xpose.msra.mxu0 0.0
    %89 = vmatprep.subr.mxu0 0.0
    %90 = vmatpush1.xpose.msra.mxu0 0.0
    %91 = vmatprep.subr.mxu0 0.0
    %92 = vmatpush1.xpose.msra.mxu0 0.0
    %93 = vmatprep.subr.mxu0 0.0
    %94 = vmatpush1.xpose.msra.mxu0 0.0
    %95 = vmatprep.subr.mxu0 0.0
    %96 = vmatpush1.xpose.msra.mxu0 0.0
    %97 = vmatprep.subr.mxu0 0.0
    %98 = vmatpush1.xpose.msra.mxu0 0.0
    %99 = vmatprep.subr.mxu0 0.0
    %100 = vmatpush1.xpose.msra.mxu0 0.0
    %101 = vmatprep.subr.mxu0 0.0
    %102 = vmatpush1.xpose.msra.mxu0 0.0
    %103 = vmatprep.subr.mxu0 0.0
    %104 = vmatpush1.xpose.msra.mxu0 0.0
    %105 = vmatprep.subr.mxu0 0.0
    %106 = vmatpush1.xpose.msra.mxu0 0.0
    %107 = vmatprep.subr.mxu0 0.0
    %108 = vmatpush1.xpose.msra.mxu0 0.0
    %109 = vmatprep.subr.mxu0 0.0
    %110 = vmatpush1.xpose.msra.mxu0 0.0
    %111 = vmatprep.subr.mxu0 0.0
    %112 = vmatpush1.xpose.msra.mxu0 0.0
    %113 = vmatprep.subr.mxu0 0.0
    %114 = vmatpush1.xpose.msra.mxu0 0.0
    %115 = vmatprep.subr.mxu0 0.0
    %116 = vmatpush1.xpose.msra.mxu0 0.0
    %117 = vmatprep.subr.mxu0 0.0
    %118 = vmatpush1.xpose.msra.mxu0 0.0
    %119 = vmatprep.subr.mxu0 0.0
    %120 = vmatpush1.xpose.msra.mxu0 0.0
    %121 = vmatprep.subr.mxu0 0.0
    %122 = vmatpush1.xpose.msra.mxu0 0.0
    %123 = vmatprep.subr.mxu0 0.0
    %124 = vmatpush1.xpose.msra.mxu0 0.0
    %125 = vmatprep.subr.mxu0 0.0
    %126 = vmatpush1.xpose.msra.mxu0 0.0
    %127 = vmatprep.subr.mxu0 0.0
    %128 = vmatpush1.xpose.msra.mxu0 0.0
    %129 = vmatprep.subr.mxu0 0.0
    %130 = vmatpush1.xpose.msra.mxu0 0.0
    %131 = vmatprep.subr.mxu0 0.0
    %132 = vmatpush1.xpose.msra.mxu0 0.0
    %133 = vmatprep.subr.mxu0 0.0
    %134 = vmatpush1.xpose.msra.mxu0 0.0
    %135 = vmatprep.subr.mxu0 0.0
    %136 = vmatpush1.xpose.msra.mxu0 0.0
    %137 = vmatprep.subr.mxu0 0.0
    %138 = vmatpush1.xpose.msra.mxu0 0.0
    %139 = vmatprep.subr.mxu0 0.0
    %140 = vmatpush1.xpose.msra.mxu0 0.0
    %141 = vmatprep.subr.mxu0 0.0
    %142 = vmatpush1.xpose.msra.mxu0 0.0
    %143 = vmatprep.mubr.f32.mxu0 0.0
    %144 = vmatmul.mubr.f32.gmra.mrb[0].mxu0 %v74
    %v145 = vpop.f32.mrb[0].mxu0
    %v146 = vadd.f32 0.0, %v145
    %v147 = vpop.f32.mrb[0].mxu0
    %148 = vdwg.mxu0
    %v150 = vsel %vm72, %v67, 0
    %v153 = vsel %vm72, %v69, 0
    %155 = vmatprep.subr.mxu0 0.0
    %156 = vmatpush1.xpose.msra.mxu0 %v153
    %157 = vmatprep.subr.mxu0 0.0
    %158 = vmatpush1.xpose.msra.mxu0 0.0
    %159 = vmatprep.subr.mxu0 0.0
    %160 = vmatpush1.xpose.msra.mxu0 0.0
    %161 = vmatprep.subr.mxu0 0.0
    %162 = vmatpush1.xpose.msra.mxu0 0.0
    %163 = vmatprep.subr.mxu0 0.0
    %164 = vmatpush1.xpose.msra.mxu0 0.0
    %165 = vmatprep.subr.mxu0 0.0
    %166 = vmatpush1.xpose.msra.mxu0 0.0
    %167 = vmatprep.subr.mxu0 0.0
    %168 = vmatpush1.xpose.msra.mxu0 0.0
    %169 = vmatprep.subr.mxu0 0.0
    %170 = vmatpush1.xpose.msra.mxu0 0.0
    %171 = vmatprep.subr.mxu0 0.0
    %172 = vmatpush1.xpose.msra.mxu0 0.0
    %173 = vmatprep.subr.mxu0 0.0
    %174 = vmatpush1.xpose.msra.mxu0 0.0
    %175 = vmatprep.subr.mxu0 0.0
    %176 = vmatpush1.xpose.msra.mxu0 0.0
    %177 = vmatprep.subr.mxu0 0.0
    %178 = vmatpush1.xpose.msra.mxu0 0.0
    %179 = vmatprep.subr.mxu0 0.0
    %180 = vmatpush1.xpose.msra.mxu0 0.0
    %181 = vmatprep.subr.mxu0 0.0
    %182 = vmatpush1.xpose.msra.mxu0 0.0
    %183 = vmatprep.subr.mxu0 0.0
    %184 = vmatpush1.xpose.msra.mxu0 0.0
    %185 = vmatprep.subr.mxu0 0.0
    %186 = vmatpush1.xpose.msra.mxu0 0.0
    %187 = vmatprep.subr.mxu0 0.0
    %188 = vmatpush1.xpose.msra.mxu0 0.0
    %189 = vmatprep.subr.mxu0 0.0
    %190 = vmatpush1.xpose.msra.mxu0 0.0
    %191 = vmatprep.subr.mxu0 0.0
    %192 = vmatpush1.xpose.msra.mxu0 0.0
    %193 = vmatprep.subr.mxu0 0.0
    %194 = vmatpush1.xpose.msra.mxu0 0.0
    %195 = vmatprep.subr.mxu0 0.0
    %196 = vmatpush1.xpose.msra.mxu0 0.0
    %197 = vmatprep.subr.mxu0 0.0
    %198 = vmatpush1.xpose.msra.mxu0 0.0
    %199 = vmatprep.subr.mxu0 0.0
    %200 = vmatpush1.xpose.msra.mxu0 0.0
    %201 = vmatprep.subr.mxu0 0.0
    %202 = vmatpush1.xpose.msra.mxu0 0.0
    %203 = vmatprep.subr.mxu0 0.0
    %204 = vmatpush1.xpose.msra.mxu0 0.0
    %205 = vmatprep.subr.mxu0 0.0
    %206 = vmatpush1.xpose.msra.mxu0 0.0
    %207 = vmatprep.subr.mxu0 0.0
    %208 = vmatpush1.xpose.msra.mxu0 0.0
    %209 = vmatprep.subr.mxu0 0.0
    %210 = vmatpush1.xpose.msra.mxu0 0.0
    %211 = vmatprep.subr.mxu0 0.0
    %212 = vmatpush1.xpose.msra.mxu0 0.0
    %213 = vmatprep.subr.mxu0 0.0
    %214 = vmatpush1.xpose.msra.mxu0 0.0
    %215 = vmatprep.subr.mxu0 0.0
    %216 = vmatpush1.xpose.msra.mxu0 0.0
    %217 = vmatprep.subr.mxu0 0.0
    %218 = vmatpush1.xpose.msra.mxu0 0.0
    %219 = vmatprep.mubr.f32.mxu0 0.0
    %220 = vmatmul.mubr.f32.gmra.mrb[0].mxu0 %v150
    %v221 = vpop.f32.mrb[0].mxu0
    %v222 = vadd.f32 0.0, %v221
    %v223 = vpop.f32.mrb[0].mxu0
    %224 = vdwg.mxu0
    %v225 = vld [vmem:[%s3] sm:$0x3]
    %v226 = vld [vmem:[%s3 + $0x2] sm:$0x3]
    %vm227 = vnez %v225
    %vm228 = vnez %v226
    %v229 = vsel %vm227, 16843009, 0
    %v230 = vsel %vm228, 16843009, 0
    %v231 = vunpack.c.0.s8 %v229
    %v232 = vunpack.c.0.s8 %v230
    %vm233 = vcmp.ne.s32.totalorder %v231, 0
    %vm234 = vcmp.ne.s32.totalorder %v232, 0
    %v235 = vsel %vm233, -1e+30, %v146
    %v236 = vsel %vm234, -1e+30, %v222
    %vm237 = vcmask 64512
    %v238 = vsel %vm237, %v235, -inf
    %239 = vmax.xlane.f32.xlu0 %v238
    %v240 = vpop.xlane.xlu0 %239
    %v241 = vsel %vm237, %v236, -inf
    %242 = vmax.xlane.f32.xlu0 %v241
    %v243 = vpop.xlane.xlu0 %242
    %v244 = vsub.f32 %v235, %v240
    %v245 = vsub.f32 %v236, %v243
    %v246 = vmul.f32 %v244, 1.442695
    %v247 = vpow.pop %v246
    %v248 = vmul.f32 %v245, 1.442695
    %v249 = vpow.pop %v248
    %v250 = vsel %vm237, %v247, 0.0
    %251 = vadd.xlane.f32.xlu0 %v250
    %v252 = vpop.xlane.xlu0 %251
    %v253 = vsel %vm237, %v249, 0.0
    %254 = vadd.xlane.f32.xlu0 %v253
    %v255 = vpop.xlane.xlu0 %254
    %v256 = vrcp.pop %v252
    %v257 = vrcp.pop %v255
    %v258 = vmul.f32 %v247, %v256
    %v259 = vmul.f32 %v249, %v257
    %260 = vst.msk [vmem:[#allocation9] sm:$0xff] %vm237, %v258
    %261 = vst.msk [vmem:[#allocation9 + $0x8] sm:$0xff] %vm237, %v259
    %v263 = vsel %vm237, %v258, 0
    %265 = vmatprep.subr.mxu0 0.0
    %266 = vmatpush1.msra.mxu0 %v70
    %267 = vmatprep.subr.mxu0 0.0
    %268 = vmatpush1.msra.mxu0 0.0
    %269 = vmatprep.subr.mxu0 0.0
    %270 = vmatpush1.msra.mxu0 0.0
    %271 = vmatprep.subr.mxu0 0.0
    %272 = vmatpush1.msra.mxu0 0.0
    %273 = vmatprep.subr.mxu0 0.0
    %274 = vmatpush1.msra.mxu0 0.0
    %275 = vmatprep.subr.mxu0 0.0
    %276 = vmatpush1.msra.mxu0 0.0
    %277 = vmatprep.subr.mxu0 0.0
    %278 = vmatpush1.msra.mxu0 0.0
    %279 = vmatprep.subr.mxu0 0.0
    %280 = vmatpush1.msra.mxu0 0.0
    %281 = vmatprep.subr.mxu0 0.0
    %282 = vmatpush1.msra.mxu0 0.0
    %283 = vmatprep.subr.mxu0 0.0
    %284 = vmatpush1.msra.mxu0 0.0
    %285 = vmatprep.subr.mxu0 0.0
    %286 = vmatpush1.msra.mxu0 0.0
    %287 = vmatprep.subr.mxu0 0.0
    %288 = vmatpush1.msra.mxu0 0.0
    %289 = vmatprep.subr.mxu0 0.0
    %290 = vmatpush1.msra.mxu0 0.0
    %291 = vmatprep.subr.mxu0 0.0
    %292 = vmatpush1.msra.mxu0 0.0
    %293 = vmatprep.subr.mxu0 0.0
    %294 = vmatpush1.msra.mxu0 0.0
    %295 = vmatprep.subr.mxu0 0.0
    %296 = vmatpush1.msra.mxu0 0.0
    %297 = vmatprep.subr.mxu0 0.0
    %298 = vmatpush1.msra.mxu0 0.0
    %299 = vmatprep.subr.mxu0 0.0
    %300 = vmatpush1.msra.mxu0 0.0
    %301 = vmatprep.subr.mxu0 0.0
    %302 = vmatpush1.msra.mxu0 0.0
    %303 = vmatprep.subr.mxu0 0.0
    %304 = vmatpush1.msra.mxu0 0.0
    %305 = vmatprep.subr.mxu0 0.0
    %306 = vmatpush1.msra.mxu0 0.0
    %307 = vmatprep.subr.mxu0 0.0
    %308 = vmatpush1.msra.mxu0 0.0
    %309 = vmatprep.subr.mxu0 0.0
    %310 = vmatpush1.msra.mxu0 0.0
    %311 = vmatprep.subr.mxu0 0.0
    %312 = vmatpush1.msra.mxu0 0.0
    %313 = vmatprep.subr.mxu0 0.0
    %314 = vmatpush1.msra.mxu0 0.0
    %315 = vmatprep.subr.mxu0 0.0
    %316 = vmatpush1.msra.mxu0 0.0
    %317 = vmatprep.subr.mxu0 0.0
    %318 = vmatpush1.msra.mxu0 0.0
    %319 = vmatprep.subr.mxu0 0.0
    %320 = vmatpush1.msra.mxu0 0.0
    %321 = vmatprep.subr.mxu0 0.0
    %322 = vmatpush1.msra.mxu0 0.0
    %323 = vmatprep.subr.mxu0 0.0
    %324 = vmatpush1.msra.mxu0 0.0
    %325 = vmatprep.subr.mxu0 0.0
    %326 = vmatpush1.msra.mxu0 0.0
    %327 = vmatprep.subr.mxu0 0.0
    %328 = vmatpush1.msra.mxu0 0.0
    %329 = vmatprep.mubr.f32.mxu0 0.0
    %330 = vmatmul.mubr.f32.gmra.mrb[0].mxu0 %v263
    %v331 = vpop.f32.mrb[0].mxu0
    %v332 = vadd.f32 0.0, %v331
    %v333 = vpop.f32.mrb[0].mxu0
    %334 = vdwg.mxu0
    %v336 = vsel %vm237, %v259, 0
    %338 = vmatprep.subr.mxu0 0.0
    %339 = vmatpush1.msra.mxu0 %v71
    %340 = vmatprep.subr.mxu0 0.0
    %341 = vmatpush1.msra.mxu0 0.0
    %342 = vmatprep.subr.mxu0 0.0
    %343 = vmatpush1.msra.mxu0 0.0
    %344 = vmatprep.subr.mxu0 0.0
    %345 = vmatpush1.msra.mxu0 0.0
    %346 = vmatprep.subr.mxu0 0.0
    %347 = vmatpush1.msra.mxu0 0.0
    %348 = vmatprep.subr.mxu0 0.0
    %349 = vmatpush1.msra.mxu0 0.0
    %350 = vmatprep.subr.mxu0 0.0
    %351 = vmatpush1.msra.mxu0 0.0
    %352 = vmatprep.subr.mxu0 0.0
    %353 = vmatpush1.msra.mxu0 0.0
    %354 = vmatprep.subr.mxu0 0.0
    %355 = vmatpush1.msra.mxu0 0.0
    %356 = vmatprep.subr.mxu0 0.0
    %357 = vmatpush1.msra.mxu0 0.0
    %358 = vmatprep.subr.mxu0 0.0
    %359 = vmatpush1.msra.mxu0 0.0
    %360 = vmatprep.subr.mxu0 0.0
    %361 = vmatpush1.msra.mxu0 0.0
    %362 = vmatprep.subr.mxu0 0.0
    %363 = vmatpush1.msra.mxu0 0.0
    %364 = vmatprep.subr.mxu0 0.0
    %365 = vmatpush1.msra.mxu0 0.0
    %366 = vmatprep.subr.mxu0 0.0
    %367 = vmatpush1.msra.mxu0 0.0
    %368 = vmatprep.subr.mxu0 0.0
    %369 = vmatpush1.msra.mxu0 0.0
    %370 = vmatprep.subr.mxu0 0.0
    %371 = vmatpush1.msra.mxu0 0.0
    %372 = vmatprep.subr.mxu0 0.0
    %373 = vmatpush1.msra.mxu0 0.0
    %374 = vmatprep.subr.mxu0 0.0
    %375 = vmatpush1.msra.mxu0 0.0
    %376 = vmatprep.subr.mxu0 0.0
    %377 = vmatpush1.msra.mxu0 0.0
    %378 = vmatprep.subr.mxu0 0.0
    %379 = vmatpush1.msra.mxu0 0.0
    %380 = vmatprep.subr.mxu0 0.0
    %381 = vmatpush1.msra.mxu0 0.0
    %382 = vmatprep.subr.mxu0 0.0
    %383 = vmatpush1.msra.mxu0 0.0
    %384 = vmatprep.subr.mxu0 0.0
    %385 = vmatpush1.msra.mxu0 0.0
    %386 = vmatprep.subr.mxu0 0.0
    %387 = vmatpush1.msra.mxu0 0.0
    %388 = vmatprep.subr.mxu0 0.0
    %389 = vmatpush1.msra.mxu0 0.0
    %390 = vmatprep.subr.mxu0 0.0
    %391 = vmatpush1.msra.mxu0 0.0
    %392 = vmatprep.subr.mxu0 0.0
    %393 = vmatpush1.msra.mxu0 0.0
    %394 = vmatprep.subr.mxu0 0.0
    %395 = vmatpush1.msra.mxu0 0.0
    %396 = vmatprep.subr.mxu0 0.0
    %397 = vmatpush1.msra.mxu0 0.0
    %398 = vmatprep.subr.mxu0 0.0
    %399 = vmatpush1.msra.mxu0 0.0
    %400 = vmatprep.subr.mxu0 0.0
    %401 = vmatpush1.msra.mxu0 0.0
    %402 = vmatprep.mubr.f32.mxu0 0.0
    %403 = vmatmul.mubr.f32.gmra.mrb[0].mxu0 %v336
    %v404 = vpop.f32.mrb[0].mxu0
    %v405 = vadd.f32 0.0, %v404
    %v406 = vpop.f32.mrb[0].mxu0
    %407 = vdwg.mxu0
    %408 = vst.msk [vmem:[#allocation8] sm:$0xff] %vm72, %v332
    %409 = vst.msk [vmem:[#allocation8 + $0x8] sm:$0xff] %vm72, %v405
    // Predicated region
    $region30: #{tpu_custom_call.1} parent=1 // pred_check
      _
    $region31: #{tpu_custom_call.1} parent=1 // pred_check_branch
      %411 = sbr.rel (0) target = $region33
    $region32: #{tpu_custom_call.1} parent=1 // pred_region
      %s413 = ssub.s32 256, 256
      %414 = vsyncadd [#allocation4], %s413
      %s415 = sshll.u32 [#allocation8], 4
      %s416 = int_to_ptr.vmem [resolvable:$true] %s415
      %421 = dma.vmem_to_hbm [thread:$0]  %s416, 256, %s4, [#allocation4], 128, 128, 8
    $region33: #{tpu_custom_call.1} parent=1 // pred_fallthru
      _
    // Predicated region
    $region34: #{tpu_custom_call.1} parent=1 // pred_check
      _
    $region35: #{tpu_custom_call.1} parent=1 // pred_check_branch
      %423 = sbr.rel (0) target = $region37
    $region36: #{tpu_custom_call.1} parent=1 // pred_region
      %s425 = ssub.s32 256, 256
      %426 = vsyncadd [#allocation10], %s425
      %s427 = sshll.u32 [#allocation9], 4
      %s428 = int_to_ptr.vmem [resolvable:$true] %s427
      %433 = dma.vmem_to_hbm [thread:$0]  %s428, 256, %s5, [#allocation10], 128, 128, 8
    $region37: #{tpu_custom_call.1} parent=1 // pred_fallthru
      _
    // Predicated region
    $region38: #{tpu_custom_call.1} parent=1 // pred_check
      _
    $region39: #{tpu_custom_call.1} parent=1 // pred_check_branch
      %435 = sbr.rel (0) target = $region41
    $region40: #{tpu_custom_call.1} parent=1 // pred_region
      %436 = dma.done [#allocation4], 256
    $region41: #{tpu_custom_call.1} parent=1 // pred_fallthru
      _
    // Predicated region
    $region42: #{tpu_custom_call.1} parent=1 // pred_check
      _
    $region43: #{tpu_custom_call.1} parent=1 // pred_check_branch
      %438 = sbr.rel (0) target = $region45
    $region44: #{tpu_custom_call.1} parent=1 // pred_region
      %439 = dma.done [#allocation10], 256
    $region45: #{tpu_custom_call.1} parent=1 // pred_fallthru
      _
    %440 = vsyncpa [#allocation3], 1
    %441 = vsyncpa [#allocation6], 1
    %442 = vsyncpa [#allocation4], 1
    %443 = vsyncpa [#allocation10], 1

</llo_original>
